<compile_context>
chip_gen: v5e
topology: v5e:2x2
jax: 0.10.0
libtpu: 0.0.40
codegen_flags: <defaults>
</compile_context>

<pallas_src>
import functools

import jax
import jax.numpy as jnp
import numpy as np
from jax import lax
from jax.experimental import pallas as pl
from jax.experimental.pallas import tpu as pltpu


ROW0 = 16  # bf16-tile-aligned row offset of the intermediate inside the hpad scratch


# ----------------------------------------------------------------------------
# Fused Pallas kernel
# ----------------------------------------------------------------------------
def fused_basicblock_kernel(H, xpad_ref, ta_ref, tb_ref, ss_ref, out_ref, hpad_ref):
    """out = relu(bn_b(conv_b(relu(bn_a(conv_a(x))))) + x) for lane_pack images.

    Layouts (rows on sublanes, (image, width, channel) packed on lanes):
      xpad_ref : (1, H+2, L_in)   bf16  rows zero-padded, NO column padding
      ta_ref   : (3, L_in,  L_out) bf16  block-diag block-Toeplitz weights, conv_a
      tb_ref   : (3, L_out, L_out) bf16  block-diag block-Toeplitz weights, conv_b
      ss_ref   : (4, L_out) f32  rows = [scale_a, shift_a, scale_b, shift_b]
      out_ref  : (1, H, L_out) f32
      hpad_ref : VMEM bf16 scratch; intermediate at rows [ROW0, ROW0+H),
                 rows ROW0-1 and ROW0+H are the zero row-halo.
    """
    f32 = jnp.float32

    # ---- stage 1: conv_a (3x3) + bn_a + relu -------------------------------
    acc = jnp.dot(xpad_ref[0, 0:H, :], ta_ref[0], preferred_element_type=f32)
    acc += jnp.dot(xpad_ref[0, 1:H + 1, :], ta_ref[1], preferred_element_type=f32)
    acc += jnp.dot(xpad_ref[0, 2:H + 2, :], ta_ref[2], preferred_element_type=f32)
    h = jnp.maximum(acc * ss_ref[0:1, :] + ss_ref[1:2, :], 0.0)       # f32 (H, L_out)

    # Intermediate (plus its 2-row halo) stays in VMEM -- no HBM round trip.
    zero_row = jnp.zeros((1, hpad_ref.shape[1]), hpad_ref.dtype)
    hpad_ref[ROW0 - 1:ROW0, :] = zero_row
    hpad_ref[ROW0 + H:ROW0 + H + 1, :] = zero_row
    hpad_ref[ROW0:ROW0 + H, :] = h.astype(hpad_ref.dtype)

    # ---- stage 2: conv_b (3x3) + bn_b + residual add + relu ----------------
    acc2 = jnp.dot(hpad_ref[ROW0 - 1:ROW0 - 1 + H, :], tb_ref[0], preferred_element_type=f32)
    acc2 += jnp.dot(hpad_ref[ROW0:ROW0 + H, :], tb_ref[1], preferred_element_type=f32)
    acc2 += jnp.dot(hpad_ref[ROW0 + 1:ROW0 + 1 + H, :], tb_ref[2], preferred_element_type=f32)

    residual = xpad_ref[0, 1:H + 1, :].astype(f32)   # == x (Cin == Cout), lane-offset 0
    out_ref[0] = jnp.maximum(acc2 * ss_ref[2:3, :] + ss_ref[3:4, :] + residual, 0.0)


# ----------------------------------------------------------------------------
# One-time parameter preparation (keep OUT of the per-forward jit)
# ----------------------------------------------------------------------------
def _build_toeplitz(w_hwio, W):
    """(3,3,Cin,Cout) -> (3, W*Cin, W*Cout) per-kh block-banded width matrices.

    T[kh][w'*Cin + ci, w*Cout + co] = w[kh, w'-w+1, ci, co] if 0 <= w'-w+1 <= 2 else 0,
    so conv3x3(x, padding=1)[h, w, :] = sum_kh x_rowpad[h+kh].reshape(W*Cin) @ T[kh].
    The width halo is folded into the (masked) weights -> no column padding needed.
    """
    _, _, Cin, Cout = w_hwio.shape
    kw_idx = jnp.arange(W)[:, None] - jnp.arange(W)[None, :] + 1      # (W, W) = w' - w + 1
    valid = ((kw_idx >= 0) & (kw_idx <= 2)).astype(w_hwio.dtype)
    t = w_hwio[:, jnp.clip(kw_idx, 0, 2), :, :]                       # (3, W, W, Cin, Cout)
    t = t * valid[None, :, :, None, None]
    t = jnp.transpose(t, (0, 1, 3, 2, 4))                             # (3, W, Cin, W, Cout)
    return t.reshape(3, W * Cin, W * Cout)


def _block_diag(t, p):
    """(3, R, C) -> (3, p*R, p*C): p copies of t on the lane-packing block diagonal."""
    if p == 1:
        return t
    eye = jnp.eye(p, dtype=t.dtype)
    k, r, c = t.shape
    return jnp.einsum("pq,krc->kprqc", eye, t).reshape(k, p * r, p * c)


def choose_lane_pack(N, W, C):
    """Pack images along lanes until the output lane dim is a multiple of 128."""
    p = 1
    while (W * C * p) % 128 != 0 and N % (2 * p) == 0:
        p *= 2
    return p


def prepare_block_params(params, W, lane_pack):
    """Toeplitz weights, block-diagonal lane packing, BN scale/shift lane-tiling."""
    cin, cmid = params["w_a"].shape[2], params["w_a"].shape[3]
    cout = params["w_b"].shape[3]
    assert cin == cmid == cout, \
        "stride=1 / downsample=None basic block requires inplanes == planes"
    ta = _block_diag(_build_toeplitz(params["w_a"], W), lane_pack).astype(jnp.bfloat16)
    tb = _block_diag(_build_toeplitz(params["w_b"], W), lane_pack).astype(jnp.bfloat16)
    ss = jnp.stack([jnp.tile(params["scale_a"], lane_pack * W),
                    jnp.tile(params["shift_a"], lane_pack * W),
                    jnp.tile(params["scale_b"], lane_pack * W),
                    jnp.tile(params["shift_b"], lane_pack * W)]).astype(jnp.float32)
    return dict(ta=ta, tb=tb, ss=ss)


# ----------------------------------------------------------------------------
# Forward wrappers
# ----------------------------------------------------------------------------
@jax.jit
def basicblock_forward_nhwc(x_nhwc, prepared):
    """Fused basic block, NHWC in / NHWC out (compose whole networks in NHWC)."""
    N, H, W, C = x_nhwc.shape
    ta, tb, ss = prepared["ta"], prepared["tb"], prepared["ss"]
    L_in, L_out = ta.shape[1], ta.shape[2]
    P = L_in // (W * C)                          # images packed per grid step (lanes)
    assert N % P == 0 and L_in == P * W * C

    # bf16 MXU operands; rows zero-padded only (the W halo lives in the weights).
    xp = jnp.pad(x_nhwc.astype(jnp.bfloat16), ((0, 0), (1, 1), (0, 0), (0, 0)))
    xp = xp.reshape(N // P, P, H + 2, W * C)
    xp = jnp.transpose(xp, (0, 2, 1, 3)).reshape(N // P, H + 2, L_in)

    out = pl.pallas_call(
        functools.partial(fused_basicblock_kernel, H),
        out_shape=jax.ShapeDtypeStruct((N // P, H, L_out), jnp.float32),
        grid=(N // P,),
        in_specs=[
            pl.BlockSpec((1, H + 2, L_in), lambda n: (n, 0, 0)),
            pl.BlockSpec((3, L_in, L_out), lambda n: (0, 0, 0)),
            pl.BlockSpec((3, L_out, L_out), lambda n: (0, 0, 0)),
            pl.BlockSpec((4, L_out), lambda n: (0, 0)),
        ],
        out_specs=pl.BlockSpec((1, H, L_out), lambda n: (n, 0, 0)),
        scratch_shapes=[pltpu.VMEM((ROW0 + H + 8, L_out), jnp.bfloat16)],
        compiler_params=pltpu.CompilerParams(
            dimension_semantics=("parallel",),
            vmem_limit_bytes=32 * 1024 * 1024),
    )(xp, ta, tb, ss)

    out = out.reshape(N // P, H, P, W, C)
    return jnp.transpose(out, (0, 2, 1, 3, 4)).reshape(N, H, W, C)


@jax.jit
def resnet_basicblock_forward(x_nchw, prepared):
    # PyTorch-layout adapter for the test; real networks should stay NHWC and call
    # basicblock_forward_nhwc directly (one layout conversion per network, not per block).
    x = jnp.transpose(x_nchw, (0, 2, 3, 1))
    out = basicblock_forward_nhwc(x, prepared)
    return jnp.transpose(out, (0, 3, 1, 2))


# ----------------------------------------------------------------------------
# Parameters + pure-JAX reference (correctness check)
# ----------------------------------------------------------------------------
def make_basicblock_params(key, inplanes, planes):
    ks = jax.random.split(key, 4)
    eps = 1e-5

    def conv_w(k, cin, cout):
        fan_in = cin * 9
        return jax.random.normal(k, (3, 3, cin, cout), jnp.float32) / np.sqrt(fan_in)

    def bn(k, c):
        k0, k1, k2, k3 = jax.random.split(k, 4)
        gamma = 1.0 + 0.1 * jax.random.normal(k0, (c,), jnp.float32)
        beta = 0.1 * jax.random.normal(k1, (c,), jnp.float32)
        mean = 0.1 * jax.random.normal(k2, (c,), jnp.float32)
        var = jnp.abs(0.1 * jax.random.normal(k3, (c,), jnp.float32)) + 0.5
        scale = gamma / jnp.sqrt(var + eps)          # fold BN (eval mode)
        shift = beta - mean * scale
        return scale, shift

    w_a = conv_w(ks[0], inplanes, planes)
    scale_a, shift_a = bn(ks[1], planes)
    w_b = conv_w(ks[2], planes, planes)
    scale_b, shift_b = bn(ks[3], planes)
    return dict(w_a=w_a, scale_a=scale_a, shift_a=shift_a,
                w_b=w_b, scale_b=scale_b, shift_b=shift_b)


def reference_forward(x_nchw, params):
    x = jnp.transpose(x_nchw, (0, 2, 3, 1)).astype(jnp.float32)

    def conv(inp, w):
        return lax.conv_general_dilated(
            inp, w, window_strides=(1, 1), padding=((1, 1), (1, 1)),
            dimension_numbers=("NHWC", "HWIO", "NHWC"))

    h = conv(x, params["w_a"]) * params["scale_a"] + params["shift_a"]
    h = jnp.maximum(h, 0.0)
    o = conv(h, params["w_b"]) * params["scale_b"] + params["shift_b"]
    o = jnp.maximum(o + x, 0.0)
    return jnp.transpose(o, (0, 3, 1, 2))


if __name__ == "__main__":
    key = jax.random.PRNGKey(0)
    k_x, k_p = jax.random.split(key)

    # inplanes == planes (downsample=None, stride=1) -> residual add is valid.
    N, C, H, W = 2, 4, 16, 16
    x = jax.random.normal(k_x, (N, C, H, W), jnp.float32)     # NCHW like PyTorch
    params = make_basicblock_params(k_p, inplanes=C, planes=C)

    lane_pack = choose_lane_pack(N, W, C)                     # -> 2 : lane dim = 128
    prepared = prepare_block_params(params, W, lane_pack)     # one-time weight prep

    out = resnet_basicblock_forward(x, prepared)
    out = jax.block_until_ready(out)

    ref = reference_forward(x, params)
    # bf16 MXU operands (two conv stages) -> loosened tolerance per perf review.
    np.testing.assert_allclose(np.asarray(out), np.asarray(ref),
                               rtol=2e-2, atol=5e-2)
    assert out.shape == (N, C, H, W)
    print("KERNEL_OK")
</pallas_src>

<mosaic_0001>
module attributes {stable_mosaic.version = 11 : i64} {
  func.func @fused_basicblock_kernel(%arg0: i32, %arg1: memref<1x18x128xbf16, #tpu.memory_space<vmem>>, %arg2: memref<3x128x128xbf16, #tpu.memory_space<vmem>>, %arg3: memref<3x128x128xbf16, #tpu.memory_space<vmem>>, %arg4: memref<4x128xf32, #tpu.memory_space<vmem>>, %arg5: memref<1x16x128xf32, #tpu.memory_space<vmem>>, %arg6: memref<40x128xbf16, #tpu.memory_space<vmem>>) attributes {dimension_semantics = [#tpu.dimension_semantics<parallel>], iteration_bounds = array<i64: 1>, scalar_prefetch = 0 : i64, scratch_operands = 1 : i64, tpu.core_type = #tpu.core_type<tc>, window_params = [{transform_indices = @transform_0, window_bounds = array<i64: 1, 18, 128>}, {pipeline_mode = #tpu.pipeline_mode<synchronous>, transform_indices = @transform_1, window_bounds = array<i64: 3, 128, 128>}, {pipeline_mode = #tpu.pipeline_mode<synchronous>, transform_indices = @transform_2, window_bounds = array<i64: 3, 128, 128>}, {pipeline_mode = #tpu.pipeline_mode<synchronous>, transform_indices = @transform_3, window_bounds = array<i64: 4, 128>}, {transform_indices = @transform_4, window_bounds = array<i64: 1, 16, 128>}]} {
    %c0 = arith.constant 0 : index
    %c0_0 = arith.constant 0 : index
    %c0_1 = arith.constant 0 : index
    %0 = vector.load %arg1[%c0, %c0_0, %c0_1] : memref<1x18x128xbf16, #tpu.memory_space<vmem>>, vector<1x16x128xbf16>
    %1 = vector.shape_cast %0 : vector<1x16x128xbf16> to vector<16x128xbf16>
    %c0_2 = arith.constant 0 : index
    %c0_3 = arith.constant 0 : index
    %c0_4 = arith.constant 0 : index
    %2 = vector.load %arg2[%c0_2, %c0_3, %c0_4] : memref<3x128x128xbf16, #tpu.memory_space<vmem>>, vector<1x128x128xbf16>
    %3 = vector.shape_cast %2 : vector<1x128x128xbf16> to vector<128x128xbf16>
    %cst = arith.constant dense<0.000000e+00> : vector<16x128xf32>
    %4 = tpu.matmul %1, %3, %cst {dimension_numbers = #tpu.dot_dimension_numbers<[1], [0], [0], [1], [0, 0, 1, 1], [], []>} : vector<16x128xbf16>, vector<128x128xbf16>, vector<16x128xf32> -> vector<16x128xf32>
    %c0_5 = arith.constant 0 : index
    %c1 = arith.constant 1 : index
    %c0_6 = arith.constant 0 : index
    %5 = vector.load %arg1[%c0_5, %c1, %c0_6] : memref<1x18x128xbf16, #tpu.memory_space<vmem>>, vector<1x16x128xbf16>
    %6 = vector.shape_cast %5 : vector<1x16x128xbf16> to vector<16x128xbf16>
    %c1_7 = arith.constant 1 : index
    %c0_8 = arith.constant 0 : index
    %c0_9 = arith.constant 0 : index
    %7 = vector.load %arg2[%c1_7, %c0_8, %c0_9] : memref<3x128x128xbf16, #tpu.memory_space<vmem>>, vector<1x128x128xbf16>
    %8 = vector.shape_cast %7 : vector<1x128x128xbf16> to vector<128x128xbf16>
    %cst_10 = arith.constant dense<0.000000e+00> : vector<16x128xf32>
    %9 = tpu.matmul %6, %8, %cst_10 {dimension_numbers = #tpu.dot_dimension_numbers<[1], [0], [0], [1], [0, 0, 1, 1], [], []>} : vector<16x128xbf16>, vector<128x128xbf16>, vector<16x128xf32> -> vector<16x128xf32>
    %10 = arith.addf %4, %9 : vector<16x128xf32>
    %c0_11 = arith.constant 0 : index
    %c2 = arith.constant 2 : index
    %c0_12 = arith.constant 0 : index
    %11 = vector.load %arg1[%c0_11, %c2, %c0_12] : memref<1x18x128xbf16, #tpu.memory_space<vmem>>, vector<1x16x128xbf16>
    %12 = vector.shape_cast %11 : vector<1x16x128xbf16> to vector<16x128xbf16>
    %c2_13 = arith.constant 2 : index
    %c0_14 = arith.constant 0 : index
    %c0_15 = arith.constant 0 : index
    %13 = vector.load %arg2[%c2_13, %c0_14, %c0_15] : memref<3x128x128xbf16, #tpu.memory_space<vmem>>, vector<1x128x128xbf16>
    %14 = vector.shape_cast %13 : vector<1x128x128xbf16> to vector<128x128xbf16>
    %cst_16 = arith.constant dense<0.000000e+00> : vector<16x128xf32>
    %15 = tpu.matmul %12, %14, %cst_16 {dimension_numbers = #tpu.dot_dimension_numbers<[1], [0], [0], [1], [0, 0, 1, 1], [], []>} : vector<16x128xbf16>, vector<128x128xbf16>, vector<16x128xf32> -> vector<16x128xf32>
    %16 = arith.addf %10, %15 : vector<16x128xf32>
    %c0_17 = arith.constant 0 : index
    %c0_18 = arith.constant 0 : index
    %17 = vector.load %arg4[%c0_17, %c0_18] : memref<4x128xf32, #tpu.memory_space<vmem>>, vector<1x128xf32>
    %18 = vector.broadcast %17 : vector<1x128xf32> to vector<16x128xf32>
    %19 = arith.mulf %16, %18 : vector<16x128xf32>
    %c1_19 = arith.constant 1 : index
    %c0_20 = arith.constant 0 : index
    %20 = vector.load %arg4[%c1_19, %c0_20] : memref<4x128xf32, #tpu.memory_space<vmem>>, vector<1x128xf32>
    %21 = vector.broadcast %20 : vector<1x128xf32> to vector<16x128xf32>
    %22 = arith.addf %19, %21 : vector<16x128xf32>
    %cst_21 = arith.constant 0.000000e+00 : f32
    %23 = vector.broadcast %cst_21 : f32 to vector<16x128xf32>
    %24 = arith.maximumf %22, %23 : vector<16x128xf32>
    %cst_22 = arith.constant 0.000000e+00 : bf16
    %25 = vector.broadcast %cst_22 : bf16 to vector<1x128xbf16>
    %c15 = arith.constant 15 : index
    %c0_23 = arith.constant 0 : index
    %26 = vector.load %arg6[%c15, %c0_23] : memref<40x128xbf16, #tpu.memory_space<vmem>>, vector<1x128xbf16>
    tpu.vector_store %arg6[%c15, %c0_23], %25 {strides = array<i32>} : memref<40x128xbf16, #tpu.memory_space<vmem>>, vector<1x128xbf16>,
    %c32 = arith.constant 32 : index
    %c0_24 = arith.constant 0 : index
    %27 = vector.load %arg6[%c32, %c0_24] : memref<40x128xbf16, #tpu.memory_space<vmem>>, vector<1x128xbf16>
    tpu.vector_store %arg6[%c32, %c0_24], %25 {strides = array<i32>} : memref<40x128xbf16, #tpu.memory_space<vmem>>, vector<1x128xbf16>,
    %28 = arith.truncf %24 : vector<16x128xf32> to vector<16x128xbf16>
    %c16 = arith.constant 16 : index
    %c0_25 = arith.constant 0 : index
    %29 = vector.load %arg6[%c16, %c0_25] : memref<40x128xbf16, #tpu.memory_space<vmem>>, vector<16x128xbf16>
    tpu.vector_store %arg6[%c16, %c0_25], %28 {strides = array<i32>} : memref<40x128xbf16, #tpu.memory_space<vmem>>, vector<16x128xbf16>,
    %c15_26 = arith.constant 15 : index
    %c0_27 = arith.constant 0 : index
    %30 = vector.load %arg6[%c15_26, %c0_27] : memref<40x128xbf16, #tpu.memory_space<vmem>>, vector<16x128xbf16>
    %c0_28 = arith.constant 0 : index
    %c0_29 = arith.constant 0 : index
    %c0_30 = arith.constant 0 : index
    %31 = vector.load %arg3[%c0_28, %c0_29, %c0_30] : memref<3x128x128xbf16, #tpu.memory_space<vmem>>, vector<1x128x128xbf16>
    %32 = vector.shape_cast %31 : vector<1x128x128xbf16> to vector<128x128xbf16>
    %cst_31 = arith.constant dense<0.000000e+00> : vector<16x128xf32>
    %33 = tpu.matmul %30, %32, %cst_31 {dimension_numbers = #tpu.dot_dimension_numbers<[1], [0], [0], [1], [0, 0, 1, 1], [], []>} : vector<16x128xbf16>, vector<128x128xbf16>, vector<16x128xf32> -> vector<16x128xf32>
    %c16_32 = arith.constant 16 : index
    %c0_33 = arith.constant 0 : index
    %34 = vector.load %arg6[%c16_32, %c0_33] : memref<40x128xbf16, #tpu.memory_space<vmem>>, vector<16x128xbf16>
    %c1_34 = arith.constant 1 : index
    %c0_35 = arith.constant 0 : index
    %c0_36 = arith.constant 0 : index
    %35 = vector.load %arg3[%c1_34, %c0_35, %c0_36] : memref<3x128x128xbf16, #tpu.memory_space<vmem>>, vector<1x128x128xbf16>
    %36 = vector.shape_cast %35 : vector<1x128x128xbf16> to vector<128x128xbf16>
    %cst_37 = arith.constant dense<0.000000e+00> : vector<16x128xf32>
    %37 = tpu.matmul %34, %36, %cst_37 {dimension_numbers = #tpu.dot_dimension_numbers<[1], [0], [0], [1], [0, 0, 1, 1], [], []>} : vector<16x128xbf16>, vector<128x128xbf16>, vector<16x128xf32> -> vector<16x128xf32>
    %38 = arith.addf %33, %37 : vector<16x128xf32>
    %c17 = arith.constant 17 : index
    %c0_38 = arith.constant 0 : index
    %39 = vector.load %arg6[%c17, %c0_38] : memref<40x128xbf16, #tpu.memory_space<vmem>>, vector<16x128xbf16>
    %c2_39 = arith.constant 2 : index
    %c0_40 = arith.constant 0 : index
    %c0_41 = arith.constant 0 : index
    %40 = vector.load %arg3[%c2_39, %c0_40, %c0_41] : memref<3x128x128xbf16, #tpu.memory_space<vmem>>, vector<1x128x128xbf16>
    %41 = vector.shape_cast %40 : vector<1x128x128xbf16> to vector<128x128xbf16>
    %cst_42 = arith.constant dense<0.000000e+00> : vector<16x128xf32>
    %42 = tpu.matmul %39, %41, %cst_42 {dimension_numbers = #tpu.dot_dimension_numbers<[1], [0], [0], [1], [0, 0, 1, 1], [], []>} : vector<16x128xbf16>, vector<128x128xbf16>, vector<16x128xf32> -> vector<16x128xf32>
    %43 = arith.addf %38, %42 : vector<16x128xf32>
    %c0_43 = arith.constant 0 : index
    %c1_44 = arith.constant 1 : index
    %c0_45 = arith.constant 0 : index
    %44 = vector.load %arg1[%c0_43, %c1_44, %c0_45] : memref<1x18x128xbf16, #tpu.memory_space<vmem>>, vector<1x16x128xbf16>
    %45 = vector.shape_cast %44 : vector<1x16x128xbf16> to vector<16x128xbf16>
    %46 = arith.extf %45 : vector<16x128xbf16> to vector<16x128xf32>
    %c2_46 = arith.constant 2 : index
    %c0_47 = arith.constant 0 : index
    %47 = vector.load %arg4[%c2_46, %c0_47] : memref<4x128xf32, #tpu.memory_space<vmem>>, vector<1x128xf32>
    %48 = vector.broadcast %47 : vector<1x128xf32> to vector<16x128xf32>
    %49 = arith.mulf %43, %48 : vector<16x128xf32>
    %c3 = arith.constant 3 : index
    %c0_48 = arith.constant 0 : index
    %50 = vector.load %arg4[%c3, %c0_48] : memref<4x128xf32, #tpu.memory_space<vmem>>, vector<1x128xf32>
    %51 = vector.broadcast %50 : vector<1x128xf32> to vector<16x128xf32>
    %52 = arith.addf %49, %51 : vector<16x128xf32>
    %53 = arith.addf %52, %46 : vector<16x128xf32>
    %cst_49 = arith.constant 0.000000e+00 : f32
    %54 = vector.broadcast %cst_49 : f32 to vector<16x128xf32>
    %55 = arith.maximumf %53, %54 : vector<16x128xf32>
    %c0_50 = arith.constant 0 : index
    %c0_51 = arith.constant 0 : index
    %c0_52 = arith.constant 0 : index
    %56 = vector.load %arg5[%c0_50, %c0_51, %c0_52] : memref<1x16x128xf32, #tpu.memory_space<vmem>>, vector<1x16x128xf32>
    %57 = vector.shape_cast %56 : vector<1x16x128xf32> to vector<16x128xf32>
    %58 = vector.shape_cast %55 : vector<16x128xf32> to vector<1x16x128xf32>
    tpu.vector_store %arg5[%c0_50, %c0_51, %c0_52], %58 {strides = array<i32>} : memref<1x16x128xf32, #tpu.memory_space<vmem>>, vector<1x16x128xf32>,
    return
  }
  func.func @transform_0(%arg0: i32) -> (i32, i32, i32) {
    %c0_i32 = arith.constant 0 : i32
    %c0_i32_0 = arith.constant 0 : i32
    %c0_i32_1 = arith.constant 0 : i32
    return %arg0, %c0_i32, %c0_i32_0 : i32, i32, i32
  }
  func.func @transform_1(%arg0: i32) -> (i32, i32, i32) {
    %c0_i32 = arith.constant 0 : i32
    %c0_i32_0 = arith.constant 0 : i32
    %c0_i32_1 = arith.constant 0 : i32
    %c0_i32_2 = arith.constant 0 : i32
    return %c0_i32, %c0_i32_0, %c0_i32_1 : i32, i32, i32
  }
  func.func @transform_2(%arg0: i32) -> (i32, i32, i32) {
    %c0_i32 = arith.constant 0 : i32
    %c0_i32_0 = arith.constant 0 : i32
    %c0_i32_1 = arith.constant 0 : i32
    %c0_i32_2 = arith.constant 0 : i32
    return %c0_i32, %c0_i32_0, %c0_i32_1 : i32, i32, i32
  }
  func.func @transform_3(%arg0: i32) -> (i32, i32) {
    %c0_i32 = arith.constant 0 : i32
    %c0_i32_0 = arith.constant 0 : i32
    %c0_i32_1 = arith.constant 0 : i32
    return %c0_i32, %c0_i32_0 : i32, i32
  }
  func.func @transform_4(%arg0: i32) -> (i32, i32, i32) {
    %c0_i32 = arith.constant 0 : i32
    %c0_i32_0 = arith.constant 0 : i32
    %c0_i32_1 = arith.constant 0 : i32
    return %arg0, %c0_i32, %c0_i32_0 : i32, i32, i32
  }
}

</mosaic_0001>

<llo_original>
// kernel: basicblock_forward_nhwc.1
$region0: #{basicblock_forward_nhwc.1}
  #allocation0 [shape = 'u32[]', space=smem, size = 0x4, offset = 0x4, fixed_abs, tag = 'smem constant byte address 0x4 - core index']
  #allocation1 [shape = 'u32[72,128]{1,0:T(1,128)}', space=vmem, size = 0x9000, scoped, tag = 'internal scratch']
  #allocation2 [shape = 'bf16[40,128]{1,0:T(8,128)(2,1)}', space=vmem, size = 0x2800, scoped, tag = 'scratch operand']
  %s0 = inlined_call_operand.vmem [shape: bf16[1,18,128], index: 0, kind: input, shape index: {}]
  %s1 = inlined_call_operand.vmem [shape: bf16[3,128,128], index: 1, kind: input, shape index: {}]
  %s2 = inlined_call_operand.vmem [shape: bf16[3,128,128], index: 2, kind: input, shape index: {}]
  %s3 = inlined_call_operand.vmem [shape: f32[4,128], index: 3, kind: input, shape index: {}]
  %s4 = inlined_call_operand.vmem [shape: f32[1,16,128], index: 4, kind: output, shape index: {}]
  %s5 = sld [smem:[#allocation0]]
  $region26: #{basicblock_forward_nhwc.1} parent=0
    _
  %s7 = ssub.s32 1, %s5
  %s8 = scalar_select 0, %s7, %s5
  // Predicated region
  $region2: #{basicblock_forward_nhwc.1} parent=0 // pred_check
    _
  $region3: #{basicblock_forward_nhwc.1} parent=0 // pred_check_branch
    %10 = sbr.rel (0) target = $region5
  $region4: #{basicblock_forward_nhwc.1} parent=0 // pred_region
    _
  $region5: #{basicblock_forward_nhwc.1} parent=0 // pred_fallthru
    _
  // Predicated region
  $region6: #{basicblock_forward_nhwc.1} parent=0 // pred_check
    _
  $region7: #{basicblock_forward_nhwc.1} parent=0 // pred_check_branch
    %12 = sbr.rel (0) target = $region9
  $region8: #{basicblock_forward_nhwc.1} parent=0 // pred_region
    _
  $region9: #{basicblock_forward_nhwc.1} parent=0 // pred_fallthru
    _
  // Predicated region
  $region10: #{basicblock_forward_nhwc.1} parent=0 // pred_check
    _
  $region11: #{basicblock_forward_nhwc.1} parent=0 // pred_check_branch
    %14 = sbr.rel (0) target = $region13
  $region12: #{basicblock_forward_nhwc.1} parent=0 // pred_region
    _
  $region13: #{basicblock_forward_nhwc.1} parent=0 // pred_fallthru
    _
  // Predicated region
  $region14: #{basicblock_forward_nhwc.1} parent=0 // pred_check
    _
  $region15: #{basicblock_forward_nhwc.1} parent=0 // pred_check_branch
    %16 = sbr.rel (0) target = $region17
  $region16: #{basicblock_forward_nhwc.1} parent=0 // pred_region
    _
  $region17: #{basicblock_forward_nhwc.1} parent=0 // pred_fallthru
    _
  %v18 = vld [vmem:[%s0] sm:$0xf]
  %v19 = vld [vmem:[%s0 + $0x4] sm:$0xf]
  %v20 = vld [vmem:[%s1] sm:$0xf]
  %v21 = vld [vmem:[%s1 + $0x4] sm:$0xf]
  %v22 = vld [vmem:[%s1 + $0x8] sm:$0xf]
  %v23 = vld [vmem:[%s1 + $0xc] sm:$0xf]
  %v24 = vld [vmem:[%s1 + $0x10] sm:$0xf]
  %v25 = vld [vmem:[%s1 + $0x14] sm:$0xf]
  %v26 = vld [vmem:[%s1 + $0x18] sm:$0xf]
  %v27 = vld [vmem:[%s1 + $0x1c] sm:$0xf]
  %v28 = vld [vmem:[%s1 + $0x20] sm:$0xf]
  %v29 = vld [vmem:[%s1 + $0x24] sm:$0xf]
  %v30 = vld [vmem:[%s1 + $0x28] sm:$0xf]
  %v31 = vld [vmem:[%s1 + $0x2c] sm:$0xf]
  %v32 = vld [vmem:[%s1 + $0x30] sm:$0xf]
  %v33 = vld [vmem:[%s1 + $0x34] sm:$0xf]
  %v34 = vld [vmem:[%s1 + $0x38] sm:$0xf]
  %v35 = vld [vmem:[%s1 + $0x3c] sm:$0xf]
  %v36 = vld [vmem:[%s0 + $0x8] sm:$0x1]
  %s37 = scalar_lea.vmem %s1, 64
  %v38 = vld [vmem:[%s37] sm:$0xf]
  %v39 = vld [vmem:[%s37 + $0x4] sm:$0xf]
  %v40 = vld [vmem:[%s37 + $0x8] sm:$0xf]
  %v41 = vld [vmem:[%s37 + $0xc] sm:$0xf]
  %v42 = vld [vmem:[%s37 + $0x10] sm:$0xf]
  %v43 = vld [vmem:[%s37 + $0x14] sm:$0xf]
  %v44 = vld [vmem:[%s37 + $0x18] sm:$0xf]
  %v45 = vld [vmem:[%s37 + $0x1c] sm:$0xf]
  %v46 = vld [vmem:[%s37 + $0x20] sm:$0xf]
  %v47 = vld [vmem:[%s37 + $0x24] sm:$0xf]
  %v48 = vld [vmem:[%s37 + $0x28] sm:$0xf]
  %v49 = vld [vmem:[%s37 + $0x2c] sm:$0xf]
  %v50 = vld [vmem:[%s37 + $0x30] sm:$0xf]
  %v51 = vld [vmem:[%s37 + $0x34] sm:$0xf]
  %v52 = vld [vmem:[%s37 + $0x38] sm:$0xf]
  %v53 = vld [vmem:[%s37 + $0x3c] sm:$0xf]
  %v57 = vunpack.c.l.b16 %v18
  %v58 = vunpack.c.l.b16 %v19
  %v59 = vunpack.c.l.b16 %v36
  %v60 = vpack.c.b16 %v58, %v57
  %v61 = vpack.c.b16 %v59, %v59
  %vm62 = vsmask.f32 7424
  %v64 = vshrl.u32 %v60, 16
  %v66 = vshll.u32 %v60, 16
  %v68 = vrot.slane %v66, 1
  %v69 = vor.u32 %v64, %v68
  %v71 = vshll.u32 %v61, 16
  %v73 = vrot.slane %v71, 1
  %v74 = vsel %vm62, %v69, %v73
  %v92 = vunpack.c.l.b16 %v38
  %v93 = vunpack.c.l.b16 %v39
  %v94 = vunpack.c.l.b16 %v40
  %v95 = vunpack.c.l.b16 %v41
  %v96 = vunpack.c.l.b16 %v42
  %v97 = vunpack.c.l.b16 %v43
  %v98 = vunpack.c.l.b16 %v44
  %v99 = vunpack.c.l.b16 %v45
  %v100 = vunpack.c.l.b16 %v46
  %v101 = vunpack.c.l.b16 %v47
  %v102 = vunpack.c.l.b16 %v48
  %v103 = vunpack.c.l.b16 %v49
  %v104 = vunpack.c.l.b16 %v50
  %v105 = vunpack.c.l.b16 %v51
  %v106 = vunpack.c.l.b16 %v52
  %v107 = vunpack.c.l.b16 %v53
  %v108 = vpack.c.b16 %v93, %v92
  %v109 = vpack.c.b16 %v95, %v94
  %v110 = vpack.c.b16 %v97, %v96
  %v111 = vpack.c.b16 %v99, %v98
  %v112 = vpack.c.b16 %v101, %v100
  %v113 = vpack.c.b16 %v103, %v102
  %v114 = vpack.c.b16 %v105, %v104
  %v115 = vpack.c.b16 %v107, %v106
  %124 = vmatpush.bf16.msra.mxu0 %v115
  %125 = vmatpush.bf16.msra.mxu0 %v114
  %126 = vmatpush.bf16.msra.mxu0 %v113
  %127 = vmatpush.bf16.msra.mxu0 %v112
  %128 = vmatpush.bf16.msra.mxu0 %v111
  %129 = vmatpush.bf16.msra.mxu0 %v110
  %130 = vmatpush.bf16.msra.mxu0 %v109
  %131 = vmatpush.bf16.msra.mxu0 %v108
  %132 = vmatmul.bf16.gmra.mxu0 %v74
  %v133 = vpop.f32.mrf.mxu0
  %v134 = vadd.f32 0.0, %v133
  %v135 = vpop.f32.mrf.mxu0
  %v136 = vadd.f32 0.0, %v135
  %137 = vdwg.mxu0
  %v155 = vunpack.c.l.b16 %v20
  %v156 = vunpack.c.l.b16 %v21
  %v157 = vunpack.c.l.b16 %v22
  %v158 = vunpack.c.l.b16 %v23
  %v159 = vunpack.c.l.b16 %v24
  %v160 = vunpack.c.l.b16 %v25
  %v161 = vunpack.c.l.b16 %v26
  %v162 = vunpack.c.l.b16 %v27
  %v163 = vunpack.c.l.b16 %v28
  %v164 = vunpack.c.l.b16 %v29
  %v165 = vunpack.c.l.b16 %v30
  %v166 = vunpack.c.l.b16 %v31
  %v167 = vunpack.c.l.b16 %v32
  %v168 = vunpack.c.l.b16 %v33
  %v169 = vunpack.c.l.b16 %v34
  %v170 = vunpack.c.l.b16 %v35
  %v171 = vpack.c.b16 %v156, %v155
  %v172 = vpack.c.b16 %v158, %v157
  %v173 = vpack.c.b16 %v160, %v159
  %v174 = vpack.c.b16 %v162, %v161
  %v175 = vpack.c.b16 %v164, %v163
  %v176 = vpack.c.b16 %v166, %v165
  %v177 = vpack.c.b16 %v168, %v167
  %v178 = vpack.c.b16 %v170, %v169
  %187 = vmatpush.bf16.msra.mxu0 %v178
  %188 = vmatpush.bf16.msra.mxu0 %v177
  %189 = vmatpush.bf16.msra.mxu0 %v176
  %190 = vmatpush.bf16.msra.mxu0 %v175
  %191 = vmatpush.bf16.msra.mxu0 %v174
  %192 = vmatpush.bf16.msra.mxu0 %v173
  %193 = vmatpush.bf16.msra.mxu0 %v172
  %194 = vmatpush.bf16.msra.mxu0 %v171
  %195 = vmatmul.bf16.gmra.mxu0 %v60
  %v196 = vpop.f32.mrf.mxu0
  %v197 = vadd.f32 %v134, %v196
  %v198 = vpop.f32.mrf.mxu0
  %v199 = vadd.f32 %v136, %v198
  %200 = vdwg.mxu0
  %v201 = vld [vmem:[%s0] sm:$0xe]
  %s202 = scalar_lea.vmem %s1, 128
  %v203 = vld [vmem:[%s202] sm:$0xf]
  %v204 = vld [vmem:[%s202 + $0x4] sm:$0xf]
  %v205 = vld [vmem:[%s202 + $0x8] sm:$0xf]
  %v206 = vld [vmem:[%s202 + $0xc] sm:$0xf]
  %v207 = vld [vmem:[%s202 + $0x10] sm:$0xf]
  %v208 = vld [vmem:[%s202 + $0x14] sm:$0xf]
  %v209 = vld [vmem:[%s202 + $0x18] sm:$0xf]
  %v210 = vld [vmem:[%s202 + $0x1c] sm:$0xf]
  %v211 = vld [vmem:[%s202 + $0x20] sm:$0xf]
  %v212 = vld [vmem:[%s202 + $0x24] sm:$0xf]
  %v213 = vld [vmem:[%s202 + $0x28] sm:$0xf]
  %v214 = vld [vmem:[%s202 + $0x2c] sm:$0xf]
  %v215 = vld [vmem:[%s202 + $0x30] sm:$0xf]
  %v216 = vld [vmem:[%s202 + $0x34] sm:$0xf]
  %v217 = vld [vmem:[%s202 + $0x38] sm:$0xf]
  %v218 = vld [vmem:[%s202 + $0x3c] sm:$0xf]
  %v220 = vunpack.c.l.b16 %v201
  %v221 = vpack.c.b16 %v58, %v220
  %vm222 = vcmask 1046528
  %v223 = vrot.slane %v221, 1
  %v224 = vrot.slane %v61, 1
  %v225 = vsel %vm222, %v223, %v224
  %v243 = vunpack.c.l.b16 %v203
  %v244 = vunpack.c.l.b16 %v204
  %v245 = vunpack.c.l.b16 %v205
  %v246 = vunpack.c.l.b16 %v206
  %v247 = vunpack.c.l.b16 %v207
  %v248 = vunpack.c.l.b16 %v208
  %v249 = vunpack.c.l.b16 %v209
  %v250 = vunpack.c.l.b16 %v210
  %v251 = vunpack.c.l.b16 %v211
  %v252 = vunpack.c.l.b16 %v212
  %v253 = vunpack.c.l.b16 %v213
  %v254 = vunpack.c.l.b16 %v214
  %v255 = vunpack.c.l.b16 %v215
  %v256 = vunpack.c.l.b16 %v216
  %v257 = vunpack.c.l.b16 %v217
  %v258 = vunpack.c.l.b16 %v218
  %v259 = vpack.c.b16 %v244, %v243
  %v260 = vpack.c.b16 %v246, %v245
  %v261 = vpack.c.b16 %v248, %v247
  %v262 = vpack.c.b16 %v250, %v249
  %v263 = vpack.c.b16 %v252, %v251
  %v264 = vpack.c.b16 %v254, %v253
  %v265 = vpack.c.b16 %v256, %v255
  %v266 = vpack.c.b16 %v258, %v257
  %275 = vmatpush.bf16.msra.mxu0 %v266
  %276 = vmatpush.bf16.msra.mxu0 %v265
  %277 = vmatpush.bf16.msra.mxu0 %v264
  %278 = vmatpush.bf16.msra.mxu0 %v263
  %279 = vmatpush.bf16.msra.mxu0 %v262
  %280 = vmatpush.bf16.msra.mxu0 %v261
  %281 = vmatpush.bf16.msra.mxu0 %v260
  %282 = vmatpush.bf16.msra.mxu0 %v259
  %283 = vmatmul.bf16.gmra.mxu0 %v225
  %v284 = vpop.f32.mrf.mxu0
  %v285 = vadd.f32 0.0, %v284
  %v286 = vpop.f32.mrf.mxu0
  %v287 = vadd.f32 0.0, %v286
  %288 = vdwg.mxu0
  %v289 = vadd.f32 %v197, %v285
  %v290 = vadd.f32 %v199, %v287
  %v291 = vld [vmem:[%s3] sm:$0x1]
  %v292 = vperm.slane %v291, 0
  %v293 = vmul.f32 %v289, %v292
  %v294 = vmul.f32 %v290, %v292
  %v295 = vld [vmem:[%s3 + $0x1] sm:$0x1]
  %v296 = vperm.slane %v295, 0
  %v297 = vadd.f32 %v293, %v296
  %v298 = vadd.f32 %v294, %v296
  %v299 = vmax.f32 %v297, 0.0
  %v300 = vmax.f32 %v298, 0.0
  %vm301 = vcmask 1043459
  %vm302 = vsmask.f32 7950
  %vm303 = vmand %vm301, %vm302
  %v304 = vld [vmem:[#allocation2 + $0x4] sm:$0x8]
  %v305 = vsel %vm303, 0, %v304
  %306 = vst [vmem:[#allocation2 + $0x4] sm:$0x8] %v305
  %vm307 = vcmask 1040384
  %vm308 = vsmask.f32 256
  %vm309 = vmand %vm307, %vm308
  %v310 = vld [vmem:[#allocation2 + $0x10] sm:$0x1]
  %v311 = vsel %vm309, 0, %v310
  %312 = vst [vmem:[#allocation2 + $0x10] sm:$0x1] %v311
  %v313 = vpack.c.bf16 %v299, %v299
  %v314 = vpack.c.bf16 %v300, %v300
  %315 = vst [vmem:[#allocation2 + $0x8] sm:$0xf] %v313
  %316 = vst [vmem:[#allocation2 + $0xc] sm:$0xf] %v314
  %v317 = vld [vmem:[#allocation2 + $0x4] sm:$0x8]
  %v318 = vld [vmem:[#allocation2 + $0x8] sm:$0xf]
  %v319 = vld [vmem:[#allocation2 + $0xc] sm:$0xf]
  %v320 = vld [vmem:[%s2] sm:$0xf]
  %v321 = vld [vmem:[%s2 + $0x4] sm:$0xf]
  %v322 = vld [vmem:[%s2 + $0x8] sm:$0xf]
  %v323 = vld [vmem:[%s2 + $0xc] sm:$0xf]
  %v324 = vld [vmem:[%s2 + $0x10] sm:$0xf]
  %v325 = vld [vmem:[%s2 + $0x14] sm:$0xf]
  %v326 = vld [vmem:[%s2 + $0x18] sm:$0xf]
  %v327 = vld [vmem:[%s2 + $0x1c] sm:$0xf]
  %v328 = vld [vmem:[%s2 + $0x20] sm:$0xf]
  %v329 = vld [vmem:[%s2 + $0x24] sm:$0xf]
  %v330 = vld [vmem:[%s2 + $0x28] sm:$0xf]
  %v331 = vld [vmem:[%s2 + $0x2c] sm:$0xf]
  %v332 = vld [vmem:[%s2 + $0x30] sm:$0xf]
  %v333 = vld [vmem:[%s2 + $0x34] sm:$0xf]
  %v334 = vld [vmem:[%s2 + $0x38] sm:$0xf]
  %v335 = vld [vmem:[%s2 + $0x3c] sm:$0xf]
  %s336 = scalar_lea.vmem %s2, 64
  %v337 = vld [vmem:[%s336] sm:$0xf]
  %v338 = vld [vmem:[%s336 + $0x4] sm:$0xf]
  %v339 = vld [vmem:[%s336 + $0x8] sm:$0xf]
  %v340 = vld [vmem:[%s336 + $0xc] sm:$0xf]
  %v341 = vld [vmem:[%s336 + $0x10] sm:$0xf]
  %v342 = vld [vmem:[%s336 + $0x14] sm:$0xf]
  %v343 = vld [vmem:[%s336 + $0x18] sm:$0xf]
  %v344 = vld [vmem:[%s336 + $0x1c] sm:$0xf]
  %v345 = vld [vmem:[%s336 + $0x20] sm:$0xf]
  %v346 = vld [vmem:[%s336 + $0x24] sm:$0xf]
  %v347 = vld [vmem:[%s336 + $0x28] sm:$0xf]
  %v348 = vld [vmem:[%s336 + $0x2c] sm:$0xf]
  %v349 = vld [vmem:[%s336 + $0x30] sm:$0xf]
  %v350 = vld [vmem:[%s336 + $0x34] sm:$0xf]
  %v351 = vld [vmem:[%s336 + $0x38] sm:$0xf]
  %v352 = vld [vmem:[%s336 + $0x3c] sm:$0xf]
  %v355 = vunpack.c.l.b16 %v318
  %v356 = vunpack.c.l.b16 %v319
  %v357 = vpack.c.b16 %v356, %v355
  %v375 = vunpack.c.l.b16 %v337
  %v376 = vunpack.c.l.b16 %v338
  %v377 = vunpack.c.l.b16 %v339
  %v378 = vunpack.c.l.b16 %v340
  %v379 = vunpack.c.l.b16 %v341
  %v380 = vunpack.c.l.b16 %v342
  %v381 = vunpack.c.l.b16 %v343
  %v382 = vunpack.c.l.b16 %v344
  %v383 = vunpack.c.l.b16 %v345
  %v384 = vunpack.c.l.b16 %v346
  %v385 = vunpack.c.l.b16 %v347
  %v386 = vunpack.c.l.b16 %v348
  %v387 = vunpack.c.l.b16 %v349
  %v388 = vunpack.c.l.b16 %v350
  %v389 = vunpack.c.l.b16 %v351
  %v390 = vunpack.c.l.b16 %v352
  %v391 = vpack.c.b16 %v376, %v375
  %v392 = vpack.c.b16 %v378, %v377
  %v393 = vpack.c.b16 %v380, %v379
  %v394 = vpack.c.b16 %v382, %v381
  %v395 = vpack.c.b16 %v384, %v383
  %v396 = vpack.c.b16 %v386, %v385
  %v397 = vpack.c.b16 %v388, %v387
  %v398 = vpack.c.b16 %v390, %v389
  %407 = vmatpush.bf16.msra.mxu0 %v398
  %408 = vmatpush.bf16.msra.mxu0 %v397
  %409 = vmatpush.bf16.msra.mxu0 %v396
  %410 = vmatpush.bf16.msra.mxu0 %v395
  %411 = vmatpush.bf16.msra.mxu0 %v394
  %412 = vmatpush.bf16.msra.mxu0 %v393
  %413 = vmatpush.bf16.msra.mxu0 %v392
  %414 = vmatpush.bf16.msra.mxu0 %v391
  %415 = vmatmul.bf16.gmra.mxu0 %v357
  %v416 = vpop.f32.mrf.mxu0
  %v417 = vadd.f32 0.0, %v416
  %v418 = vpop.f32.mrf.mxu0
  %v419 = vadd.f32 0.0, %v418
  %420 = vdwg.mxu0
  %v422 = vunpack.c.l.b16 %v317
  %v423 = vpack.c.b16 %v355, %v422
  %v424 = vpack.c.b16 %v356, %v356
  %vm425 = vsmask.f32 4352
  %v427 = vshrl.u32 %v423, 16
  %v429 = vrot.slane %v427, 3
  %v430 = vshll.u32 %v423, 16
  %v432 = vrot.slane %v430, 4
  %v433 = vor.u32 %v429, %v432
  %v435 = vshrl.u32 %v424, 16
  %v437 = vrot.slane %v435, 3
  %v438 = vshll.u32 %v424, 16
  %v440 = vrot.slane %v438, 4
  %v441 = vor.u32 %v437, %v440
  %v442 = vsel %vm425, %v433, %v441
  %v460 = vunpack.c.l.b16 %v320
  %v461 = vunpack.c.l.b16 %v321
  %v462 = vunpack.c.l.b16 %v322
  %v463 = vunpack.c.l.b16 %v323
  %v464 = vunpack.c.l.b16 %v324
  %v465 = vunpack.c.l.b16 %v325
  %v466 = vunpack.c.l.b16 %v326
  %v467 = vunpack.c.l.b16 %v327
  %v468 = vunpack.c.l.b16 %v328
  %v469 = vunpack.c.l.b16 %v329
  %v470 = vunpack.c.l.b16 %v330
  %v471 = vunpack.c.l.b16 %v331
  %v472 = vunpack.c.l.b16 %v332
  %v473 = vunpack.c.l.b16 %v333
  %v474 = vunpack.c.l.b16 %v334
  %v475 = vunpack.c.l.b16 %v335
  %v476 = vpack.c.b16 %v461, %v460
  %v477 = vpack.c.b16 %v463, %v462
  %v478 = vpack.c.b16 %v465, %v464
  %v479 = vpack.c.b16 %v467, %v466
  %v480 = vpack.c.b16 %v469, %v468
  %v481 = vpack.c.b16 %v471, %v470
  %v482 = vpack.c.b16 %v473, %v472
  %v483 = vpack.c.b16 %v475, %v474
  %492 = vmatpush.bf16.msra.mxu0 %v483
  %493 = vmatpush.bf16.msra.mxu0 %v482
  %494 = vmatpush.bf16.msra.mxu0 %v481
  %495 = vmatpush.bf16.msra.mxu0 %v480
  %496 = vmatpush.bf16.msra.mxu0 %v479
  %497 = vmatpush.bf16.msra.mxu0 %v478
  %498 = vmatpush.bf16.msra.mxu0 %v477
  %499 = vmatpush.bf16.msra.mxu0 %v476
  %500 = vmatmul.bf16.gmra.mxu0 %v442
  %v501 = vpop.f32.mrf.mxu0
  %v502 = vadd.f32 %v417, %v501
  %v503 = vpop.f32.mrf.mxu0
  %v504 = vadd.f32 %v419, %v503
  %505 = vdwg.mxu0
  %v506 = vld [vmem:[#allocation2 + $0x8] sm:$0xf]
  %v507 = vld [vmem:[#allocation2 + $0xc] sm:$0xf]
  %v508 = vld [vmem:[#allocation2 + $0x10] sm:$0x1]
  %s509 = scalar_lea.vmem %s2, 128
  %v510 = vld [vmem:[%s509] sm:$0xf]
  %v511 = vld [vmem:[%s509 + $0x4] sm:$0xf]
  %v512 = vld [vmem:[%s509 + $0x8] sm:$0xf]
  %v513 = vld [vmem:[%s509 + $0xc] sm:$0xf]
  %v514 = vld [vmem:[%s509 + $0x10] sm:$0xf]
  %v515 = vld [vmem:[%s509 + $0x14] sm:$0xf]
  %v516 = vld [vmem:[%s509 + $0x18] sm:$0xf]
  %v517 = vld [vmem:[%s509 + $0x1c] sm:$0xf]
  %v518 = vld [vmem:[%s509 + $0x20] sm:$0xf]
  %v519 = vld [vmem:[%s509 + $0x24] sm:$0xf]
  %v520 = vld [vmem:[%s509 + $0x28] sm:$0xf]
  %v521 = vld [vmem:[%s509 + $0x2c] sm:$0xf]
  %v522 = vld [vmem:[%s509 + $0x30] sm:$0xf]
  %v523 = vld [vmem:[%s509 + $0x34] sm:$0xf]
  %v524 = vld [vmem:[%s509 + $0x38] sm:$0xf]
  %v525 = vld [vmem:[%s509 + $0x3c] sm:$0xf]
  %v529 = vunpack.c.l.b16 %v506
  %v530 = vunpack.c.l.b16 %v507
  %v531 = vunpack.c.l.b16 %v508
  %v532 = vpack.c.b16 %v530, %v529
  %v533 = vpack.c.b16 %v531, %v531
  %v535 = vshrl.u32 %v532, 16
  %v537 = vshll.u32 %v532, 16
  %v539 = vrot.slane %v537, 1
  %v540 = vor.u32 %v535, %v539
  %v542 = vshll.u32 %v533, 16
  %v544 = vrot.slane %v542, 1
  %v545 = vsel %vm62, %v540, %v544
  %v563 = vunpack.c.l.b16 %v510
  %v564 = vunpack.c.l.b16 %v511
  %v565 = vunpack.c.l.b16 %v512
  %v566 = vunpack.c.l.b16 %v513
  %v567 = vunpack.c.l.b16 %v514
  %v568 = vunpack.c.l.b16 %v515
  %v569 = vunpack.c.l.b16 %v516
  %v570 = vunpack.c.l.b16 %v517
  %v571 = vunpack.c.l.b16 %v518
  %v572 = vunpack.c.l.b16 %v519
  %v573 = vunpack.c.l.b16 %v520
  %v574 = vunpack.c.l.b16 %v521
  %v575 = vunpack.c.l.b16 %v522
  %v576 = vunpack.c.l.b16 %v523
  %v577 = vunpack.c.l.b16 %v524
  %v578 = vunpack.c.l.b16 %v525
  %v579 = vpack.c.b16 %v564, %v563
  %v580 = vpack.c.b16 %v566, %v565
  %v581 = vpack.c.b16 %v568, %v567
  %v582 = vpack.c.b16 %v570, %v569
  %v583 = vpack.c.b16 %v572, %v571
  %v584 = vpack.c.b16 %v574, %v573
  %v585 = vpack.c.b16 %v576, %v575
  %v586 = vpack.c.b16 %v578, %v577
  %595 = vmatpush.bf16.msra.mxu0 %v586
  %596 = vmatpush.bf16.msra.mxu0 %v585
  %597 = vmatpush.bf16.msra.mxu0 %v584
  %598 = vmatpush.bf16.msra.mxu0 %v583
  %599 = vmatpush.bf16.msra.mxu0 %v582
  %600 = vmatpush.bf16.msra.mxu0 %v581
  %601 = vmatpush.bf16.msra.mxu0 %v580
  %602 = vmatpush.bf16.msra.mxu0 %v579
  %603 = vmatmul.bf16.gmra.mxu0 %v545
  %v604 = vpop.f32.mrf.mxu0
  %v605 = vadd.f32 0.0, %v604
  %v606 = vpop.f32.mrf.mxu0
  %v607 = vadd.f32 0.0, %v606
  %608 = vdwg.mxu0
  %v609 = vadd.f32 %v502, %v605
  %v610 = vadd.f32 %v504, %v607
  %v611 = vld [vmem:[%s0] sm:$0xf]
  %v612 = vld [vmem:[%s0 + $0x4] sm:$0xf]
  %v613 = vld [vmem:[%s0 + $0x8] sm:$0x1]
  %v614 = vunpack.c.l.bf16 %v611
  %v615 = vunpack.c.l.bf16 %v612
  %v616 = vunpack.c.l.bf16 %v613
  %v617 = vld [vmem:[%s3 + $0x2] sm:$0x1]
  %v618 = vperm.slane %v617, 0
  %v619 = vmul.f32 %v609, %v618
  %v620 = vmul.f32 %v610, %v618
  %v621 = vld [vmem:[%s3 + $0x3] sm:$0x1]
  %v622 = vperm.slane %v621, 0
  %v623 = vadd.f32 %v619, %v622
  %v624 = vadd.f32 %v620, %v622
  %vm628 = vcmask 1046528
  %v629 = vrot.slane %v614, 1
  %v630 = vrot.slane %v615, 1
  %v631 = vsel %vm628, %v629, %v630
  %v632 = vrot.slane %v616, 1
  %v633 = vsel %vm628, %v630, %v632
  %v636 = vadd.f32 %v623, %v631
  %v637 = vadd.f32 %v624, %v633
  %v638 = vmax.f32 %v636, 0.0
  %v639 = vmax.f32 %v637, 0.0
  %640 = vst [vmem:[%s4] sm:$0xff] %v638
  %641 = vst [vmem:[%s4 + $0x8] sm:$0xff] %v639
  // Predicated region
  $region18: #{basicblock_forward_nhwc.1} parent=0 // pred_check
    _
  $region19: #{basicblock_forward_nhwc.1} parent=0 // pred_check_branch
    %643 = sbr.rel (0) target = $region21
  $region20: #{basicblock_forward_nhwc.1} parent=0 // pred_region
    _
  $region21: #{basicblock_forward_nhwc.1} parent=0 // pred_fallthru
    _
  // Predicated region
  $region22: #{basicblock_forward_nhwc.1} parent=0 // pred_check
    _
  $region23: #{basicblock_forward_nhwc.1} parent=0 // pred_check_branch
    %645 = sbr.rel (0) target = $region25
  $region24: #{basicblock_forward_nhwc.1} parent=0 // pred_region
    _
  $region25: #{basicblock_forward_nhwc.1} parent=0 // pred_fallthru
    _

</llo_original>
